<compile_context>
chip_gen: v6e
topology: v6e:2x2x1
jax: 0.10.0
libtpu: 0.0.40
codegen_flags: <defaults>
</compile_context>

<pallas_src>
import functools

import jax
import jax.numpy as jnp
from jax.experimental import pallas as pl
from jax.experimental.pallas import tpu as pltpu

_LANE = 128
_SMALL_PROBLEM = 64 * 1024          # below this many elements plain jnp wins
_TARGET_BLOCK_ELEMS = 256 * 1024    # ~1 MiB (f32) per input per grid step
_MAX_TILE_LANES = 32768             # lanes per step ceiling (multiple of 128)


def _round_up(x, m):
    return ((x + m - 1) // m) * m


def _make_kernel(*, batch, n_spatial, sb, tile_n, n_k_per, mask_rows, mask_cols):
    """Builds the reduction kernel with all shape constants closed over."""
    chunks = tile_n // _LANE

    def kernel(pred_ref, targ_ref, mask_ref, iloss_ref, msum_ref):
        k = pl.program_id(2)

        @pl.when(k == 0)
        def _init():
            iloss_ref[...] = jnp.zeros_like(iloss_ref)
            msum_ref[...] = jnp.zeros_like(msum_ref)

        p = pred_ref[...].astype(jnp.float32)
        t = targ_ref[...].astype(jnp.float32)
        m = mask_ref[...].astype(jnp.float32)
        res = p - t
        contrib = m * res * res

        # Ragged edge blocks: out-of-range lanes / rows hold unspecified data
        # (we never jnp.pad the HBM inputs), so zero them with iota masks.
        if mask_cols:
            s = pl.program_id(0)
            col0 = (s * n_k_per + k) * tile_n
            col = col0 + jax.lax.broadcasted_iota(jnp.int32, (sb, tile_n), 1)
            valid = col < n_spatial
            contrib = jnp.where(valid, contrib, 0.0)
            m = jnp.where(valid, m, 0.0)
        if mask_rows:
            b = pl.program_id(1)
            row = b * sb + jax.lax.broadcasted_iota(jnp.int32, (sb, tile_n), 0)
            valid = row < batch
            contrib = jnp.where(valid, contrib, 0.0)
            m = jnp.where(valid, m, 0.0)

        # Lane-dense partial reduce: (sb, tile_n) -> (sb, 128). The cross-lane
        # collapse of the final 128 lanes happens once in the wrapper.
        part_l = jnp.sum(contrib.reshape(sb, chunks, _LANE), axis=1)
        part_m = jnp.sum(m.reshape(sb, chunks, _LANE), axis=1)
        iloss_ref[...] += part_l
        msum_ref[...] += part_m

    return kernel


def _per_image_sums_reference(prediction, target, mask):
    p = prediction.astype(jnp.float32)
    t = target.astype(jnp.float32)
    m = mask.astype(jnp.float32)
    res = p - t
    return jnp.sum(m * res * res, axis=(1, 2)), jnp.sum(m, axis=(1, 2))


def _per_image_sums(prediction, target, mask, *, force_pallas=False,
                    target_block_elems=_TARGET_BLOCK_ELEMS,
                    max_tile_lanes=_MAX_TILE_LANES):
    """Returns (image_loss[B], M[B]) in float32."""
    B, H, W = prediction.shape
    N = H * W

    if not force_pallas and B * N < _SMALL_PROBLEM:
        # Small-problem fast path: per-grid-step overhead would dominate.
        return _per_image_sums_reference(prediction, target, mask)

    # Flattened lane-dense views; dtypes are passed through unchanged
    # (bf16 pred/target, bool/int8 mask cut HBM traffic).
    p = prediction.reshape(B, N)
    t = target.reshape(B, N)
    m = mask.reshape(B, N)

    # ---- Adaptive block sizing: ~1 MiB (f32) per input per grid step. ----
    tile_n = min(_round_up(N, _LANE), max_tile_lanes)          # multiple of 128
    target_rows = _round_up(max(8, target_block_elems // tile_n), 8)
    sb = B if B <= target_rows else target_rows                # sb==B or sb%8==0
    n_b = pl.cdiv(B, sb)
    n_col_blocks = pl.cdiv(N, tile_n)

    # Small batch (single batch block) cannot shard across v7x's two TCs via
    # the batch axis -> split the spatial reduction into two parallel halves.
    n_split = 2 if (n_b == 1 and n_col_blocks >= 2) else 1
    n_k_per = pl.cdiv(n_col_blocks, n_split)
    clamp_k = n_split * n_k_per > n_col_blocks          # odd #blocks: duplicate
    mask_rows = (n_b * sb) != B
    mask_cols = (n_split * n_k_per * tile_n) != N

    def in_index(s, b_idx, k):
        col = s * n_k_per + k
        if clamp_k:
            # Clamp to a valid block; its contribution is zeroed in-kernel.
            col = jnp.minimum(col, n_col_blocks - 1)
        return (b_idx, col)

    in_spec = pl.BlockSpec((sb, tile_n), in_index)
    out_spec = pl.BlockSpec((None, sb, _LANE), lambda s, b_idx, k: (s, b_idx, 0))

    kernel = _make_kernel(batch=B, n_spatial=N, sb=sb, tile_n=tile_n,
                          n_k_per=n_k_per, mask_rows=mask_rows,
                          mask_cols=mask_cols)

    out_rows = n_b * sb
    bytes_in = B * N * (p.dtype.itemsize + t.dtype.itemsize + m.dtype.itemsize)
    bytes_out = 2 * n_split * out_rows * _LANE * 4
    cost = pl.CostEstimate(flops=5 * B * N, transcendentals=0,
                           bytes_accessed=int(bytes_in + bytes_out))

    block_bytes = sb * tile_n * (p.dtype.itemsize + t.dtype.itemsize
                                 + m.dtype.itemsize)
    vmem_limit = int(min(max(4 * block_bytes, 16 * 2**20), 48 * 2**20))

    iloss, msum = pl.pallas_call(
        kernel,
        out_shape=(jax.ShapeDtypeStruct((n_split, out_rows, _LANE), jnp.float32),
                   jax.ShapeDtypeStruct((n_split, out_rows, _LANE), jnp.float32)),
        grid_spec=pltpu.PrefetchScalarGridSpec(
            num_scalar_prefetch=0,
            grid=(n_split, n_b, n_k_per),
            in_specs=[in_spec, in_spec, in_spec],
            out_specs=[out_spec, out_spec],
        ),
        compiler_params=pltpu.CompilerParams(
            dimension_semantics=("parallel", "parallel", "arbitrary"),
            vmem_limit_bytes=vmem_limit,
        ),
        cost_estimate=cost,
    )(p, t, m)

    # Final collapse: sum the split halves and the 128 lanes, drop padded rows.
    image_loss = jnp.sum(iloss, axis=(0, 2))[:B]
    msum_b = jnp.sum(msum, axis=(0, 2))[:B]
    return image_loss, msum_b


def mse_loss_batch_based(prediction, target, mask, *, force_pallas=False,
                         **tuning):
    """Equivalent to MSELoss(reduction='batch-based')(prediction, target, mask)."""
    image_loss, M = _per_image_sums(prediction, target, mask,
                                    force_pallas=force_pallas, **tuning)
    divisor = 2.0 * jnp.sum(M)
    safe = jnp.where(divisor == 0.0, jnp.float32(1.0), divisor)
    # PyTorch returns python int 0 when divisor == 0; we return scalar 0.0.
    return jnp.where(divisor == 0.0, jnp.float32(0.0), jnp.sum(image_loss) / safe)


def mse_loss_image_based(prediction, target, mask, *, force_pallas=False,
                         **tuning):
    """Equivalent to MSELoss(reduction='image-based')(prediction, target, mask)."""
    image_loss, M = _per_image_sums(prediction, target, mask,
                                    force_pallas=force_pallas, **tuning)
    two_m = 2.0 * M  # PyTorch passes 2*M to the reduction.
    safe = jnp.where(two_m != 0.0, two_m, jnp.float32(1.0))
    image_loss = jnp.where(two_m != 0.0, image_loss / safe, image_loss)
    return jnp.mean(image_loss)


def _ref_losses(prediction, target, mask):
    il, M = _per_image_sums_reference(prediction, target, mask)
    den = 2.0 * jnp.sum(M)
    batch = jnp.where(den == 0.0, jnp.float32(0.0),
                      jnp.sum(il) / jnp.where(den == 0.0, 1.0, den))
    two_m = 2.0 * M
    safe = jnp.where(two_m != 0.0, two_m, jnp.float32(1.0))
    image = jnp.mean(jnp.where(two_m != 0.0, il / safe, il))
    return batch, image


if __name__ == "__main__":
    key = jax.random.PRNGKey(0)

    batch_fn = jax.jit(functools.partial(mse_loss_batch_based, force_pallas=True))
    image_fn = jax.jit(functools.partial(mse_loss_image_based, force_pallas=True))

    # 1) Small shape from the module spec, forced through the Pallas path.
    kp, kt, km = jax.random.split(key, 3)
    B, H, W = 2, 16, 16
    prediction = jax.random.normal(kp, (B, H, W), dtype=jnp.float32)
    target = jax.random.normal(kt, (B, H, W), dtype=jnp.float32)
    mask = (jax.random.uniform(km, (B, H, W)) > 0.3).astype(jnp.float32)

    loss_b = jax.block_until_ready(batch_fn(prediction, target, mask))
    loss_i = jax.block_until_ready(image_fn(prediction, target, mask))
    ref_b, ref_i = _ref_losses(prediction, target, mask)
    assert jnp.allclose(loss_b, ref_b, rtol=1e-5, atol=1e-6), (loss_b, ref_b)
    assert jnp.allclose(loss_i, ref_i, rtol=1e-5, atol=1e-6), (loss_i, ref_i)

    # All-zero mask -> both reductions return 0 (PyTorch returns int 0).
    zmask = jnp.zeros((B, H, W), jnp.float32)
    assert float(jax.block_until_ready(batch_fn(prediction, target, zmask))) == 0.0
    assert float(jax.block_until_ready(image_fn(prediction, target, zmask))) == 0.0

    # Tiny-tile kernel config to exercise the edge/split machinery at small shapes.
    sums_small_tiles = jax.jit(functools.partial(
        _per_image_sums, force_pallas=True,
        target_block_elems=4096, max_tile_lanes=512))

    # 2) Ragged spatial dim + 2-way spatial split with a clamped duplicate
    #    column block (odd number of column blocks): B=4, N=1200.
    kp2, kt2, km2 = jax.random.split(jax.random.PRNGKey(1), 3)
    p2 = jax.random.normal(kp2, (4, 30, 40), dtype=jnp.float32)
    t2 = jax.random.normal(kt2, (4, 30, 40), dtype=jnp.float32)
    m2 = (jax.random.uniform(km2, (4, 30, 40)) > 0.5).astype(jnp.float32)
    il2, M2 = jax.block_until_ready(sums_small_tiles(p2, t2, m2))
    ril2, rM2 = _per_image_sums_reference(p2, t2, m2)
    assert jnp.allclose(il2, ril2, rtol=1e-4, atol=1e-4), (il2, ril2)
    assert jnp.allclose(M2, rM2, rtol=1e-4, atol=1e-4), (M2, rM2)

    # 3) Ragged batch dim (two batch blocks, last one partial): B=20, N=384.
    kp3, kt3, km3 = jax.random.split(jax.random.PRNGKey(2), 3)
    p3 = jax.random.normal(kp3, (20, 16, 24), dtype=jnp.float32)
    t3 = jax.random.normal(kt3, (20, 16, 24), dtype=jnp.float32)
    m3 = (jax.random.uniform(km3, (20, 16, 24)) > 0.5).astype(jnp.float32)
    il3, M3 = jax.block_until_ready(sums_small_tiles(p3, t3, m3))
    ril3, rM3 = _per_image_sums_reference(p3, t3, m3)
    assert jnp.allclose(il3, ril3, rtol=1e-4, atol=1e-4), (il3, ril3)
    assert jnp.allclose(M3, rM3, rtol=1e-4, atol=1e-4), (M3, rM3)

    # 4) bf16 pred/target + bool mask on the natural (non-forced) Pallas path
    #    (reduced HBM bytes/element); reference sees the same rounded values.
    kp4, kt4, km4 = jax.random.split(jax.random.PRNGKey(3), 3)
    p4 = jax.random.normal(kp4, (16, 64, 128), dtype=jnp.float32).astype(jnp.bfloat16)
    t4 = jax.random.normal(kt4, (16, 64, 128), dtype=jnp.float32).astype(jnp.bfloat16)
    m4 = jax.random.uniform(km4, (16, 64, 128)) > 0.3          # bool mask
    loss_b4 = jax.block_until_ready(jax.jit(mse_loss_batch_based)(p4, t4, m4))
    loss_i4 = jax.block_until_ready(jax.jit(mse_loss_image_based)(p4, t4, m4))
    ref_b4, ref_i4 = _ref_losses(p4, t4, m4)
    assert jnp.allclose(loss_b4, ref_b4, rtol=1e-4, atol=1e-5), (loss_b4, ref_b4)
    assert jnp.allclose(loss_i4, ref_i4, rtol=1e-4, atol=1e-5), (loss_i4, ref_i4)

    print("KERNEL_OK")
</pallas_src>

<mosaic_0001>
module attributes {stable_mosaic.version = 11 : i64} {
  func.func @kernel(%arg0: i32, %arg1: i32, %arg2: i32, %arg3: memref<2x256xf32, #tpu.memory_space<vmem>>, %arg4: memref<2x256xf32, #tpu.memory_space<vmem>>, %arg5: memref<2x256xf32, #tpu.memory_space<vmem>>, %arg6: memref<1x2x128xf32, #tpu.memory_space<vmem>>, %arg7: memref<1x2x128xf32, #tpu.memory_space<vmem>>) attributes {dimension_semantics = [#tpu.dimension_semantics<parallel>, #tpu.dimension_semantics<parallel>, #tpu.dimension_semantics<arbitrary>], iteration_bounds = array<i64: 1, 1, 1>, scalar_prefetch = 0 : i64, scratch_operands = 0 : i64, tpu.core_type = #tpu.core_type<tc>, window_params = [{transform_indices = @transform_0, window_bounds = array<i64: 2, 256>}, {transform_indices = @transform_1, window_bounds = array<i64: 2, 256>}, {transform_indices = @transform_2, window_bounds = array<i64: 2, 256>}, {transform_indices = @transform_3, window_bounds = array<i64: 1, 2, 128>}, {transform_indices = @transform_4, window_bounds = array<i64: 1, 2, 128>}]} {
    %c0_i32 = arith.constant 0 : i32
    %0 = arith.cmpi eq, %arg2, %c0_i32 : i32
    %1 = arith.extui %0 : i1 to i32
    %c0_i32_0 = arith.constant 0 : i32
    %2 = arith.cmpi ne, %1, %c0_i32_0 : i32
    scf.if %2 {
      %cst_19 = arith.constant 0.000000e+00 : f32
      %25 = vector.broadcast %cst_19 : f32 to vector<2x128xf32>
      %c0_20 = arith.constant 0 : index
      %c0_21 = arith.constant 0 : index
      %c0_22 = arith.constant 0 : index
      %26 = vector.load %arg6[%c0_20, %c0_21, %c0_22] : memref<1x2x128xf32, #tpu.memory_space<vmem>>, vector<1x2x128xf32>
      %27 = vector.shape_cast %26 : vector<1x2x128xf32> to vector<2x128xf32>
      %28 = vector.shape_cast %25 : vector<2x128xf32> to vector<1x2x128xf32>
      tpu.vector_store %arg6[%c0_20, %c0_21, %c0_22], %28 {strides = array<i32>} : memref<1x2x128xf32, #tpu.memory_space<vmem>>, vector<1x2x128xf32>,
      %cst_23 = arith.constant 0.000000e+00 : f32
      %29 = vector.broadcast %cst_23 : f32 to vector<2x128xf32>
      %c0_24 = arith.constant 0 : index
      %c0_25 = arith.constant 0 : index
      %c0_26 = arith.constant 0 : index
      %30 = vector.load %arg7[%c0_24, %c0_25, %c0_26] : memref<1x2x128xf32, #tpu.memory_space<vmem>>, vector<1x2x128xf32>
      %31 = vector.shape_cast %30 : vector<1x2x128xf32> to vector<2x128xf32>
      %32 = vector.shape_cast %29 : vector<2x128xf32> to vector<1x2x128xf32>
      tpu.vector_store %arg7[%c0_24, %c0_25, %c0_26], %32 {strides = array<i32>} : memref<1x2x128xf32, #tpu.memory_space<vmem>>, vector<1x2x128xf32>,
    } else {
    }
    %c0 = arith.constant 0 : index
    %c0_1 = arith.constant 0 : index
    %3 = vector.load %arg3[%c0, %c0_1] : memref<2x256xf32, #tpu.memory_space<vmem>>, vector<2x256xf32>
    %c0_2 = arith.constant 0 : index
    %c0_3 = arith.constant 0 : index
    %4 = vector.load %arg4[%c0_2, %c0_3] : memref<2x256xf32, #tpu.memory_space<vmem>>, vector<2x256xf32>
    %c0_4 = arith.constant 0 : index
    %c0_5 = arith.constant 0 : index
    %5 = vector.load %arg5[%c0_4, %c0_5] : memref<2x256xf32, #tpu.memory_space<vmem>>, vector<2x256xf32>
    %6 = arith.subf %3, %4 : vector<2x256xf32>
    %7 = arith.mulf %5, %6 : vector<2x256xf32>
    %8 = arith.mulf %7, %6 : vector<2x256xf32>
    %9 = vector.shape_cast %8 : vector<2x256xf32> to vector<2x2x128xf32>
    %cst = arith.constant dense<0.000000e+00> : vector<2x128xf32>
    %10 = vector.multi_reduction <add>, %9, %cst [1] : vector<2x2x128xf32> to vector<2x128xf32>
    %11 = vector.shape_cast %5 : vector<2x256xf32> to vector<2x2x128xf32>
    %cst_6 = arith.constant dense<0.000000e+00> : vector<2x128xf32>
    %12 = vector.multi_reduction <add>, %11, %cst_6 [1] : vector<2x2x128xf32> to vector<2x128xf32>
    %c0_7 = arith.constant 0 : index
    %c0_8 = arith.constant 0 : index
    %c0_9 = arith.constant 0 : index
    %13 = vector.load %arg6[%c0_7, %c0_8, %c0_9] : memref<1x2x128xf32, #tpu.memory_space<vmem>>, vector<1x2x128xf32>
    %14 = vector.shape_cast %13 : vector<1x2x128xf32> to vector<2x128xf32>
    %15 = arith.addf %14, %10 : vector<2x128xf32>
    %c0_10 = arith.constant 0 : index
    %c0_11 = arith.constant 0 : index
    %c0_12 = arith.constant 0 : index
    %16 = vector.load %arg6[%c0_10, %c0_11, %c0_12] : memref<1x2x128xf32, #tpu.memory_space<vmem>>, vector<1x2x128xf32>
    %17 = vector.shape_cast %16 : vector<1x2x128xf32> to vector<2x128xf32>
    %18 = vector.shape_cast %15 : vector<2x128xf32> to vector<1x2x128xf32>
    tpu.vector_store %arg6[%c0_10, %c0_11, %c0_12], %18 {strides = array<i32>} : memref<1x2x128xf32, #tpu.memory_space<vmem>>, vector<1x2x128xf32>,
    %c0_13 = arith.constant 0 : index
    %c0_14 = arith.constant 0 : index
    %c0_15 = arith.constant 0 : index
    %19 = vector.load %arg7[%c0_13, %c0_14, %c0_15] : memref<1x2x128xf32, #tpu.memory_space<vmem>>, vector<1x2x128xf32>
    %20 = vector.shape_cast %19 : vector<1x2x128xf32> to vector<2x128xf32>
    %21 = arith.addf %20, %12 : vector<2x128xf32>
    %c0_16 = arith.constant 0 : index
    %c0_17 = arith.constant 0 : index
    %c0_18 = arith.constant 0 : index
    %22 = vector.load %arg7[%c0_16, %c0_17, %c0_18] : memref<1x2x128xf32, #tpu.memory_space<vmem>>, vector<1x2x128xf32>
    %23 = vector.shape_cast %22 : vector<1x2x128xf32> to vector<2x128xf32>
    %24 = vector.shape_cast %21 : vector<2x128xf32> to vector<1x2x128xf32>
    tpu.vector_store %arg7[%c0_16, %c0_17, %c0_18], %24 {strides = array<i32>} : memref<1x2x128xf32, #tpu.memory_space<vmem>>, vector<1x2x128xf32>,
    return
  }
  func.func @transform_0(%arg0: i32, %arg1: i32, %arg2: i32) -> (i32, i32) {
    %c1_i32 = arith.constant 1 : i32
    %0 = arith.muli %arg0, %c1_i32 : i32
    %1 = arith.addi %0, %arg2 : i32
    %c0_i32 = arith.constant 0 : i32
    return %arg1, %1 : i32, i32
  }
  func.func @transform_1(%arg0: i32, %arg1: i32, %arg2: i32) -> (i32, i32) {
    %c1_i32 = arith.constant 1 : i32
    %0 = arith.muli %arg0, %c1_i32 : i32
    %1 = arith.addi %0, %arg2 : i32
    %c0_i32 = arith.constant 0 : i32
    return %arg1, %1 : i32, i32
  }
  func.func @transform_2(%arg0: i32, %arg1: i32, %arg2: i32) -> (i32, i32) {
    %c1_i32 = arith.constant 1 : i32
    %0 = arith.muli %arg0, %c1_i32 : i32
    %1 = arith.addi %0, %arg2 : i32
    %c0_i32 = arith.constant 0 : i32
    return %arg1, %1 : i32, i32
  }
  func.func @transform_3(%arg0: i32, %arg1: i32, %arg2: i32) -> (i32, i32, i32) {
    %c0_i32 = arith.constant 0 : i32
    %c0_i32_0 = arith.constant 0 : i32
    return %arg0, %arg1, %c0_i32 : i32, i32, i32
  }
  func.func @transform_4(%arg0: i32, %arg1: i32, %arg2: i32) -> (i32, i32, i32) {
    %c0_i32 = arith.constant 0 : i32
    %c0_i32_0 = arith.constant 0 : i32
    return %arg0, %arg1, %c0_i32 : i32, i32, i32
  }
}

</mosaic_0001>

<llo_original>
// kernel: mse_loss_batch_based.1
$region0: #{mse_loss_batch_based.1}
  #allocation0 [shape = 'u32[]', space=smem, size = 0x4, offset = 0x4, fixed_abs, tag = 'smem constant byte address 0x4 - core index']
  #allocation1 [shape = 'u32[144,128]{1,0:T(1,128)}', space=vmem, size = 0x12000, scoped, tag = 'internal scratch']
  %s0 = inlined_call_operand.vmem [shape: f32[2,256], index: 0, kind: input, shape index: {}]
  %s1 = inlined_call_operand.vmem [shape: f32[2,256], index: 1, kind: input, shape index: {}]
  %s2 = inlined_call_operand.vmem [shape: f32[2,256], index: 2, kind: input, shape index: {}]
  %s3 = inlined_call_operand.vmem [shape: f32[1,2,128], index: 3, kind: output, shape index: {0}]
  %s4 = inlined_call_operand.vmem [shape: f32[1,2,128], index: 4, kind: output, shape index: {1}]
  %5 = xla_tuple %s3, %s4
  %s6 = sld [smem:[#allocation0]]
  $region34: #{mse_loss_batch_based.1} parent=0
    _
  %s8 = ssub.s32 1, %s6
  %s9 = scalar_select 0, %s8, %s6
  // Predicated region
  $region2: #{mse_loss_batch_based.1} parent=0 // pred_check
    _
  $region3: #{mse_loss_batch_based.1} parent=0 // pred_check_branch
    %11 = sbr.rel (0) target = $region5
  $region4: #{mse_loss_batch_based.1} parent=0 // pred_region
    %s12 = sadd.s32 0, 0
    %s13 = smul.u32 2, %s12
    %p14 = scmp.lt.s32.totalorder %s13, 1
    %s15 = scalar_select %p14, %s13, 1
    %s16 = smul.addr %s15, 2
    %s17 = scalar_lea.vmem %s0, %s16
    %s18 = sadd.s32 0, 0
    %s19 = smul.u32 2, %s18
  $region5: #{mse_loss_batch_based.1} parent=0 // pred_fallthru
    _
  // Predicated region
  $region6: #{mse_loss_batch_based.1} parent=0 // pred_check
    _
  $region7: #{mse_loss_batch_based.1} parent=0 // pred_check_branch
    %21 = sbr.rel (0) target = $region9
  $region8: #{mse_loss_batch_based.1} parent=0 // pred_region
    %s22 = sadd.s32 0, 0
    %s23 = smul.u32 2, %s22
    %p24 = scmp.lt.s32.totalorder %s23, 1
    %s25 = scalar_select %p24, %s23, 1
    %s26 = smul.addr %s25, 2
    %s27 = scalar_lea.vmem %s1, %s26
    %s28 = sadd.s32 0, 0
    %s29 = smul.u32 2, %s28
  $region9: #{mse_loss_batch_based.1} parent=0 // pred_fallthru
    _
  // Predicated region
  $region10: #{mse_loss_batch_based.1} parent=0 // pred_check
    _
  $region11: #{mse_loss_batch_based.1} parent=0 // pred_check_branch
    %31 = sbr.rel (0) target = $region13
  $region12: #{mse_loss_batch_based.1} parent=0 // pred_region
    %s32 = sadd.s32 0, 0
    %s33 = smul.u32 2, %s32
    %p34 = scmp.lt.s32.totalorder %s33, 1
    %s35 = scalar_select %p34, %s33, 1
    %s36 = smul.addr %s35, 2
    %s37 = scalar_lea.vmem %s2, %s36
    %s38 = sadd.s32 0, 0
    %s39 = smul.u32 2, %s38
  $region13: #{mse_loss_batch_based.1} parent=0 // pred_fallthru
    _
  %s40 = sadd.s32 0, 0
  %s41 = smul.u32 2, %s40
  %p42 = scmp.lt.s32.totalorder %s41, 1
  %s43 = scalar_select %p42, %s41, 1
  %s44 = smul.addr %s43, 2
  %s45 = scalar_lea.vmem %s0, %s44
  %s46 = sadd.s32 0, 0
  %s47 = smul.u32 2, %s46
  %p48 = scmp.lt.s32.totalorder %s47, 1
  %s49 = scalar_select %p48, %s47, 1
  %s50 = smul.addr %s49, 2
  %s51 = scalar_lea.vmem %s1, %s50
  %s52 = sadd.s32 0, 0
  %s53 = smul.u32 2, %s52
  %p54 = scmp.lt.s32.totalorder %s53, 1
  %s55 = scalar_select %p54, %s53, 1
  %s56 = smul.addr %s55, 2
  %s57 = scalar_lea.vmem %s2, %s56
  %s58 = sadd.s32 0, 0
  %s59 = smul.u32 2, %s58
  %p60 = scmp.lt.s32.totalorder %s59, 1
  %s61 = scalar_select %p60, %s59, 1
  %s62 = smul.addr %s61, 2
  %s63 = scalar_lea.vmem %s0, %s62
  %s64 = sadd.s32 0, 0
  %s65 = smul.u32 2, %s64
  %s66 = sadd.s32 0, 0
  %s67 = smul.u32 2, %s66
  %p68 = scmp.lt.s32.totalorder %s67, 1
  %s69 = scalar_select %p68, %s67, 1
  %s70 = smul.addr %s69, 2
  %s71 = scalar_lea.vmem %s1, %s70
  %s72 = sadd.s32 0, 0
  %s73 = smul.u32 2, %s72
  %s74 = sadd.s32 0, 0
  %s75 = smul.u32 2, %s74
  %p76 = scmp.lt.s32.totalorder %s75, 1
  %s77 = scalar_select %p76, %s75, 1
  %s78 = smul.addr %s77, 2
  %s79 = scalar_lea.vmem %s2, %s78
  %s80 = sadd.s32 0, 0
  %s81 = smul.u32 2, %s80
  %p82 = scmp.eq.s32.totalorder 0, 0
  // Predicated region
  $region14: #{mse_loss_batch_based.1} parent=0 // pred_check
    %p83 = pneg %p82
  $region15: #{mse_loss_batch_based.1} parent=0 // pred_check_branch
    %85 = sbr.rel (%p83) target = $region17
  $region16: #{mse_loss_batch_based.1} parent=0 // pred_region
    %86 = vst [vmem:[%s3] sm:$0x3] 0.0
    %87 = vst [vmem:[%s4] sm:$0x3] 0.0
  $region17: #{mse_loss_batch_based.1} parent=0 // pred_fallthru
    _
  %v88 = vld [vmem:[%s63] sm:$0xf]
  %v89 = vld [vmem:[%s71] sm:$0xf]
  %v90 = vld [vmem:[%s79] sm:$0xf]
  %v91 = vsub.f32 %v88, %v89
  %v92 = vmul.f32 %v90, %v91
  %v93 = vmul.f32 %v92, %v91
  %v95 = vrot.slane %v93, 2
  %v97 = vcombine.low %v93, %v95
  %v99 = vunpack.c.l.s4 1934713408
  %v100 = vunpack.c.0.s8 %v99
  %v101 = vlaneseq
  %v102 = vshrl.u32 %v101, 7
  %v103 = vsub.s32 %v100, %v102
  %v104 = vrot.slane %v97, %v103
  %v105 = vcombine.high %v104, 0.0
  %vm106 = vcmask 1041408
  %v107 = vsel %vm106, %v104, 0.0
  %v108 = vrot.slane %v107, 4
  %v109 = vadd.f32 %v107, %v108
  %v110 = vrot.slane %v109, 2
  %v111 = vadd.f32 %v109, %v110
  %v112 = vrot.slane %v111, 1
  %v113 = vadd.f32 %v111, %v112
  %v114 = vsel %vm106, %v105, 0.0
  %v115 = vrot.slane %v114, 4
  %v116 = vadd.f32 %v114, %v115
  %v117 = vrot.slane %v116, 2
  %v118 = vadd.f32 %v116, %v117
  %v119 = vrot.slane %v118, 1
  %v120 = vadd.f32 %v118, %v119
  %v122 = vrot.slane %v90, 2
  %v124 = vcombine.low %v90, %v122
  %v126 = vunpack.c.l.s4 1934713408
  %v127 = vunpack.c.0.s8 %v126
  %v128 = vlaneseq
  %v129 = vshrl.u32 %v128, 7
  %v130 = vsub.s32 %v127, %v129
  %v131 = vrot.slane %v124, %v130
  %v132 = vcombine.high %v131, 0.0
  %v133 = vsel %vm106, %v131, 0.0
  %v134 = vrot.slane %v133, 4
  %v135 = vadd.f32 %v133, %v134
  %v136 = vrot.slane %v135, 2
  %v137 = vadd.f32 %v135, %v136
  %v138 = vrot.slane %v137, 1
  %v139 = vadd.f32 %v137, %v138
  %v140 = vsel %vm106, %v132, 0.0
  %v141 = vrot.slane %v140, 4
  %v142 = vadd.f32 %v140, %v141
  %v143 = vrot.slane %v142, 2
  %v144 = vadd.f32 %v142, %v143
  %v145 = vrot.slane %v144, 1
  %v146 = vadd.f32 %v144, %v145
  %v147 = vld [vmem:[%s3] sm:$0x3]
  %vm150 = vcmask 1041409
  %v151 = vsel %vm150, %v120, %v113
  %v153 = vadd.f32 %v147, %v151
  %154 = vst [vmem:[%s3] sm:$0x3] %v153
  %v155 = vld [vmem:[%s4] sm:$0x3]
  %v158 = vsel %vm150, %v146, %v139
  %v160 = vadd.f32 %v155, %v158
  %161 = vst [vmem:[%s4] sm:$0x3] %v160
  // Predicated region
  $region18: #{mse_loss_batch_based.1} parent=0 // pred_check
    _
  $region19: #{mse_loss_batch_based.1} parent=0 // pred_check_branch
    %163 = sbr.rel (0) target = $region21
  $region20: #{mse_loss_batch_based.1} parent=0 // pred_region
    _
  $region21: #{mse_loss_batch_based.1} parent=0 // pred_fallthru
    _
  // Predicated region
  $region22: #{mse_loss_batch_based.1} parent=0 // pred_check
    _
  $region23: #{mse_loss_batch_based.1} parent=0 // pred_check_branch
    %165 = sbr.rel (0) target = $region25
  $region24: #{mse_loss_batch_based.1} parent=0 // pred_region
    _
  $region25: #{mse_loss_batch_based.1} parent=0 // pred_fallthru
    _
  // Predicated region
  $region26: #{mse_loss_batch_based.1} parent=0 // pred_check
    _
  $region27: #{mse_loss_batch_based.1} parent=0 // pred_check_branch
    %167 = sbr.rel (0) target = $region29
  $region28: #{mse_loss_batch_based.1} parent=0 // pred_region
    _
  $region29: #{mse_loss_batch_based.1} parent=0 // pred_fallthru
    _
  // Predicated region
  $region30: #{mse_loss_batch_based.1} parent=0 // pred_check
    _
  $region31: #{mse_loss_batch_based.1} parent=0 // pred_check_branch
    %169 = sbr.rel (0) target = $region33
  $region32: #{mse_loss_batch_based.1} parent=0 // pred_region
    _
  $region33: #{mse_loss_batch_based.1} parent=0 // pred_fallthru
    _

</llo_original>
